<compile_context>
chip_gen: v7x
topology: tpu7x:2x2x1
jax: 0.10.0
libtpu: 0.0.40
codegen_flags: <defaults>
</compile_context>

<pallas_src>
import jax
import jax.numpy as jnp
from jax.experimental import pallas as pl
from jax.experimental.pallas import tpu as pltpu


# --------------------------------------------------------------------------- #
# Kernel
# --------------------------------------------------------------------------- #
def _make_min_kernel(is_floating):
    def _min_kernel(x_ref, vals_ref, idx_ref):
        x = x_ref[...]                                     # (B, TH, TW)
        b = x.shape[0]

        # NaN-propagating min over the reduction axis (matches torch.min).
        vals = jnp.min(x, axis=0, keepdims=True)           # (1, TH, TW)

        # First-occurrence argmin.  Where the column min is finite, no NaN can
        # exist in that column (min propagates NaN), so `x <= vals` fires
        # exactly at the minima.  For NaN-min columns, `x <= NaN` is False
        # everywhere and the isnan(x) clause picks the first NaN (torch
        # semantics).
        match = x <= vals
        if is_floating:
            match = match | jnp.isnan(x)
        iota = jax.lax.broadcasted_iota(jnp.int32, x.shape, 0)
        idx = jnp.min(jnp.where(match, iota, jnp.int32(b)), axis=0,
                      keepdims=True)

        vals_ref[...] = vals.astype(vals_ref.dtype)
        idx_ref[...] = idx

    return _min_kernel


# --------------------------------------------------------------------------- #
# Tiling plan (generation- and output-aware)
# --------------------------------------------------------------------------- #
def _round_down(x, m):
    return (x // m) * m


def _round_up(x, m):
    return ((x + m - 1) // m) * m


def _sublane_pack(dtype):
    # 8 sublanes of 32-bit; sub-32-bit dtypes pack along sublanes.
    return max(8, 32 // jnp.dtype(dtype).itemsize)


def _vmem_capacity_bytes():
    try:
        return int(pltpu.get_tpu_info().vmem_capacity_bytes)
    except Exception:
        return 64 * 1024 * 1024      # conservative fallback (v7x-sized)


def _tile_plan(B, H, W, dtype):
    """Pick (TH, TW, vmem_limit_bytes) for the (B, TH, TW) input block."""
    in_item = jnp.dtype(dtype).itemsize
    sub = _sublane_pack(dtype)

    vmem_phys = _vmem_capacity_bytes()
    # v5e/v6e (128 MiB physical) -> 96 MiB scoped; v7x (64 MiB) -> 48 MiB.
    vmem_limit = min(96 << 20, (vmem_phys * 3) // 4)
    headroom = 6 << 20               # compiler internal scratch etc.

    # Per output (h, w) column: double-buffered input column + double-buffered
    # values (in_item) + double-buffered int32 indices.
    per_col = 2 * (B * in_item) + 2 * (in_item + 4)
    usable_cols = max(1, (vmem_limit - headroom) // per_col)

    # Cap the per-step input slab (HBM roofline plateaus around 8-16 MiB/step).
    target_in = (16 << 20) if vmem_phys >= (128 << 20) else (10 << 20)
    target_cols = max(1, target_in // max(1, B * in_item))
    max_cols = min(usable_cols, target_cols)

    full_w_rows = max_cols // W
    if H <= sub:
        th, tw = H, W                                    # full (small) H dim
    elif full_w_rows >= sub:
        th, tw = min(H, _round_down(full_w_rows, sub)), W
    elif W % 128 == 0 and W >= 256:
        # B*W too large for even `sub` full-width rows: tile W lane-dense.
        th = sub
        tw = max(128, min(W, _round_down(max_cols // th, 128)))
    else:
        # TODO(synk): pad W / fold H into lanes when B*W is huge and W is not
        # a multiple of 128 (keeps correctness; may exceed the byte target).
        th, tw = sub, W

    # v7x megacore: give the 'parallel' grid at least 2 steps so both
    # TensorCores get work (harmless extra ~0.35us step on v5e/v6e).
    if pl.cdiv(H, th) * pl.cdiv(W, tw) == 1 and H >= 2 * sub:
        th = max(sub, _round_up(pl.cdiv(H, 2), sub))

    return th, tw, int(vmem_limit)


# --------------------------------------------------------------------------- #
# pallas_call wrapper
# --------------------------------------------------------------------------- #
def _min_pallas_3d(x):
    B, H, W = x.shape
    in_item = jnp.dtype(x.dtype).itemsize
    TH, TW, vmem_limit = _tile_plan(B, H, W, x.dtype)
    grid = (pl.cdiv(H, TH), pl.cdiv(W, TW))

    cost = pl.CostEstimate(
        flops=3 * B * H * W,                   # compare/select work
        transcendentals=0,
        bytes_accessed=B * H * W * in_item + H * W * (in_item + 4),
    )

    values, indices = pl.pallas_call(
        _make_min_kernel(jnp.issubdtype(x.dtype, jnp.floating)),
        out_shape=(
            jax.ShapeDtypeStruct((1, H, W), x.dtype),
            jax.ShapeDtypeStruct((1, H, W), jnp.int32),
        ),
        grid_spec=pltpu.PrefetchScalarGridSpec(
            num_scalar_prefetch=0,
            grid=grid,                         # independent spatial tiles
            in_specs=[pl.BlockSpec((B, TH, TW), lambda h, w: (0, h, w))],
            out_specs=[
                pl.BlockSpec((1, TH, TW), lambda h, w: (0, h, w)),
                pl.BlockSpec((1, TH, TW), lambda h, w: (0, h, w)),
            ],
        ),
        compiler_params=pltpu.CompilerParams(
            dimension_semantics=("parallel", "parallel"),
            vmem_limit_bytes=vmem_limit,
        ),
        cost_estimate=cost,
    )(x)
    return values, indices


def net_min_forward(x):
    """Equivalent of torch.min(x, dim=0, keepdim=True) -> (values, indices)."""
    orig_shape = x.shape
    B = orig_shape[0]
    rest = orig_shape[1:]
    if len(rest) == 0:
        H, W = 1, 1
    elif len(rest) == 1:
        H, W = 1, rest[0]
    else:
        W = rest[-1]
        H = 1
        for d in rest[:-1]:
            H *= d
    x3 = x.reshape(B, H, W)
    values3, indices3 = _min_pallas_3d(x3)
    out_shape = (1,) + tuple(rest)
    return values3.reshape(out_shape), indices3.reshape(out_shape)


# --------------------------------------------------------------------------- #
# Self-test
# --------------------------------------------------------------------------- #
if __name__ == "__main__":
    key = jax.random.PRNGKey(0)
    k0, k1 = jax.random.split(key)

    # Small TPU-friendly shape: reduce over dim 0 of (8, 16, 128).
    x = jax.random.normal(k0, (8, 16, 128), dtype=jnp.float32)

    values, indices = net_min_forward(x)
    values = jax.block_until_ready(values)
    indices = jax.block_until_ready(indices)

    ref_vals = jnp.min(x, axis=0, keepdims=True)
    ref_idx = jnp.argmin(x, axis=0, keepdims=True).astype(jnp.int32)
    assert values.shape == (1, 16, 128) and indices.shape == (1, 16, 128)
    assert jnp.allclose(values, ref_vals)
    assert jnp.array_equal(indices, ref_idx)

    # NaN propagation check (torch.min propagates NaN and reports its index).
    x_nan = x.at[3, 5, 7].set(jnp.nan)
    v2, i2 = net_min_forward(x_nan)
    v2 = jax.block_until_ready(v2)
    i2 = jax.block_until_ready(i2)
    assert bool(jnp.isnan(v2[0, 5, 7]))
    assert int(i2[0, 5, 7]) == 3

    # Integer dtype + rank-2 + non-multiple-of-128 trailing dim.
    xi = jax.random.randint(k1, (6, 200), 0, 1000, dtype=jnp.int32)
    vi, ii = net_min_forward(xi)
    vi = jax.block_until_ready(vi)
    ii = jax.block_until_ready(ii)
    assert vi.shape == (1, 200) and ii.shape == (1, 200)
    assert jnp.array_equal(vi, jnp.min(xi, axis=0, keepdims=True))
    assert jnp.array_equal(
        ii, jnp.argmin(xi, axis=0, keepdims=True).astype(jnp.int32))

    print("KERNEL_OK")
</pallas_src>

<mosaic_0001>
module attributes {stable_mosaic.version = 11 : i64} {
  func.func @_min_kernel(%arg0: i32, %arg1: i32, %arg2: memref<8x8x128xf32, #tpu.memory_space<vmem>>, %arg3: memref<1x8x128xf32, #tpu.memory_space<vmem>>, %arg4: memref<1x8x128xi32, #tpu.memory_space<vmem>>) attributes {dimension_semantics = [#tpu.dimension_semantics<parallel>, #tpu.dimension_semantics<parallel>], iteration_bounds = array<i64: 2, 1>, scalar_prefetch = 0 : i64, scratch_operands = 0 : i64, tpu.core_type = #tpu.core_type<tc>, window_params = [{transform_indices = @transform_0, window_bounds = array<i64: 8, 8, 128>}, {transform_indices = @transform_1, window_bounds = array<i64: 1, 8, 128>}, {transform_indices = @transform_2, window_bounds = array<i64: 1, 8, 128>}]} {
    %c0 = arith.constant 0 : index
    %c0_0 = arith.constant 0 : index
    %c0_1 = arith.constant 0 : index
    %0 = vector.load %arg2[%c0, %c0_0, %c0_1] : memref<8x8x128xf32, #tpu.memory_space<vmem>>, vector<8x8x128xf32>
    %cst = arith.constant dense<0x7F800000> : vector<8x128xf32>
    %1 = vector.multi_reduction <minimumf>, %0, %cst [0] : vector<8x8x128xf32> to vector<8x128xf32>
    %2 = vector.shape_cast %1 : vector<8x128xf32> to vector<1x8x128xf32>
    %3 = vector.broadcast %2 : vector<1x8x128xf32> to vector<8x8x128xf32>
    %4 = arith.cmpf ole, %0, %3 : vector<8x8x128xf32>
    %5 = arith.cmpf one, %0, %0 : vector<8x8x128xf32>
    %6 = arith.ori %4, %5 : vector<8x8x128xi1>
    %7 = tpu.iota {dimensions = array<i32: 0>} : vector<8x8x128xi32>
    %c8_i32 = arith.constant 8 : i32
    %8 = vector.broadcast %c8_i32 : i32 to vector<8x8x128xi32>
    %9 = arith.select %6, %7, %8 : vector<8x8x128xi1>, vector<8x8x128xi32>
    %cst_2 = arith.constant dense<2147483647> : vector<8x128xi32>
    %10 = vector.multi_reduction <minsi>, %9, %cst_2 [0] : vector<8x8x128xi32> to vector<8x128xi32>
    %11 = vector.shape_cast %10 : vector<8x128xi32> to vector<1x8x128xi32>
    %c0_3 = arith.constant 0 : index
    %c0_4 = arith.constant 0 : index
    %c0_5 = arith.constant 0 : index
    %12 = vector.load %arg3[%c0_3, %c0_4, %c0_5] : memref<1x8x128xf32, #tpu.memory_space<vmem>>, vector<1x8x128xf32>
    tpu.vector_store %arg3[%c0_3, %c0_4, %c0_5], %2 {strides = array<i32>} : memref<1x8x128xf32, #tpu.memory_space<vmem>>, vector<1x8x128xf32>,
    %c0_6 = arith.constant 0 : index
    %c0_7 = arith.constant 0 : index
    %c0_8 = arith.constant 0 : index
    %13 = vector.load %arg4[%c0_6, %c0_7, %c0_8] : memref<1x8x128xi32, #tpu.memory_space<vmem>>, vector<1x8x128xi32>
    tpu.vector_store %arg4[%c0_6, %c0_7, %c0_8], %11 {strides = array<i32>} : memref<1x8x128xi32, #tpu.memory_space<vmem>>, vector<1x8x128xi32>,
    return
  }
  func.func @transform_0(%arg0: i32, %arg1: i32) -> (i32, i32, i32) {
    %c0_i32 = arith.constant 0 : i32
    %c0_i32_0 = arith.constant 0 : i32
    return %c0_i32, %arg0, %arg1 : i32, i32, i32
  }
  func.func @transform_1(%arg0: i32, %arg1: i32) -> (i32, i32, i32) {
    %c0_i32 = arith.constant 0 : i32
    %c0_i32_0 = arith.constant 0 : i32
    return %c0_i32, %arg0, %arg1 : i32, i32, i32
  }
  func.func @transform_2(%arg0: i32, %arg1: i32) -> (i32, i32, i32) {
    %c0_i32 = arith.constant 0 : i32
    %c0_i32_0 = arith.constant 0 : i32
    return %c0_i32, %arg0, %arg1 : i32, i32, i32
  }
}

</mosaic_0001>

<llo_original>
// kernel: tpu_custom_call.1
$region0: #{tpu_custom_call.1}
  #allocation0 [shape = 'u32[]', space=smem, size = 0x4, offset = 0x4, fixed_abs, tag = 'smem constant byte address 0x4 - core index']
  #allocation1 [shape = 'u32[144,128]{1,0:T(1,128)}', space=vmem, size = 0x12000, scoped, tag = 'internal scratch']
  %s0 = inlined_call_operand.hbm [shape: f32[8,16,128], index: 0, kind: input, shape index: {}]
  %s1 = inlined_call_operand.hbm [shape: f32[1,16,128], index: 1, kind: output, shape index: {0}]
  %s2 = inlined_call_operand.hbm [shape: s32[1,16,128], index: 2, kind: output, shape index: {1}]
  %3 = xla_tuple %s1, %s2
  %s4 = sld [smem:[#allocation0]]
  $region49: #{tpu_custom_call.1} parent=0
    _
  %s6 = ssub.s32 1, %s4
  %s7 = scalar_select 0, %s6, %s4
  $region1: #{tpu_custom_call.1} parent=0
    #allocation2 [shape = 'u8[65536]{0}', space=vmem, size = 0x10000, scoped, tag = 'input window, operand 0']
    #allocation3 [shape = 's32[2]{0}', space=sflag, size = 0x8, scoped, tag = 'scoped memory for tpu_custom_call.1']
    #allocation4 [shape = 's32[2]{0}', space=sflag, size = 0x8, scoped, tag = 'scoped memory for tpu_custom_call.1']
    #allocation5 [shape = 'u8[8192]{0}', space=vmem, size = 0x2000, scoped, tag = 'output window, operand 0']
    #allocation6 [shape = 'u8[8192]{0}', space=vmem, size = 0x2000, scoped, tag = 'output window, operand 1']
    #allocation7 [shape = 's32[2]{0}', space=sflag, size = 0x8, scoped, tag = 'scoped memory for tpu_custom_call.1']
    %8 = vsyncpa [#allocation3], 0
    %s9 = scalar_lea.sflag [#allocation3], 1
    %10 = vsyncpa %s9, 0
    %11 = vsyncpa [#allocation4], 0
    %s12 = scalar_lea.sflag [#allocation4], 1
    %13 = vsyncpa %s12, 0
    %14 = vsyncpa [#allocation7], 0
    %s15 = scalar_lea.sflag [#allocation7], 1
    %16 = vsyncpa %s15, 0
    loop: start=0, step=1, limit=4
    $region2: #{tpu_custom_call.1} parent=1 // loop_pre_header
      _
    $region3: #{tpu_custom_call.1} parent=1 // loop_header
      %s18 = sphi 0, %s22
      %p19 = scmp.ge.s32.totalorder %s18, 4
      %s25 = sphi 0, %s37
      %s26 = sphi 0, %s33
      %s27 = sphi 0, %s25
      %s28 = sphi 0, %s26
      %s29 = sphi 0, %s27
      %s30 = sphi 0, %s28
      %s42 = sphi 0, %s44
      %s45 = sphi 0, %s42
      %s46 = sphi 0, %s45
      %s62 = sphi 0, %s46
      %s70 = sphi 0, %s72
      %s73 = sphi 0, %s70
      %s74 = sphi 0, %s73
      %s90 = sphi 0, %s74
      %s98 = sphi 0, %s100
      %s101 = sphi 0, %s98
      %s102 = sphi 0, %s101
      %s118 = sphi 0, %s102
    $region4: #{tpu_custom_call.1} parent=1 // loop_header_branch
      %21 = sbr.rel (%p19) target = $region8
    $region5: #{tpu_custom_call.1} parent=1 // loop_body
      %s23 = ssub.s32 %s18, 1
      %s24 = ssub.s32 %s18, 2
      %s31 = sadd.s32 1, %s26
      %p32 = scmp.ge.s32.totalorder %s31, 1
      %s33 = scalar_select %p32, 0, %s31
      %s34 = sadd.s32 1, %s25
      %s35 = scalar_select %p32, %s34, %s25
      %p36 = scmp.ge.s32.totalorder %s35, 2
      %s37 = scalar_select %p36, 0, %s35
      %s38 = ssub.s32 %s25, %s37
      %s39 = ssub.s32 %s26, %s33
      %s40 = sor.u32 %s38, %s39
      %p41 = scmp.eq.s32.totalorder %s40, 0
      %s43 = sadd.s32 %s42, 1
      %s44 = scalar_select %p41, %s42, %s43
      %p47 = pneg %p41
      %p48 = scmp.eq.s32.totalorder %s18, 1
      %p49 = por %p47, %p48
      %p50 = scmp.ne.s32.totalorder %s42, %s45
      %p51 = scmp.eq.s32.totalorder %s18, 0
      %p52 = por %p50, %p51
      %p53 = scmp.ne.s32.totalorder %s42, %s45
      %p54 = scmp.eq.s32.totalorder %s23, 1
      %p55 = por %p53, %p54
      %p56 = scmp.ne.s32.totalorder %s45, %s46
      %p57 = scmp.eq.s32.totalorder %s23, 0
      %p58 = por %p56, %p57
      %p59 = scmp.ne.s32.totalorder %s45, %s46
      %p60 = scmp.eq.s32.totalorder %s24, 1
      %p61 = por %p59, %p60
      %p63 = scmp.ne.s32.totalorder %s46, %s62
      %p64 = scmp.eq.s32.totalorder %s24, 0
      %p65 = por %p63, %p64
      %s66 = ssub.s32 %s25, %s37
      %s67 = ssub.s32 %s26, %s33
      %s68 = sor.u32 %s66, %s67
      %p69 = scmp.eq.s32.totalorder %s68, 0
      %s71 = sadd.s32 %s70, 1
      %s72 = scalar_select %p69, %s70, %s71
      %p75 = pneg %p69
      %p76 = scmp.eq.s32.totalorder %s18, 1
      %p77 = por %p75, %p76
      %p78 = scmp.ne.s32.totalorder %s70, %s73
      %p79 = scmp.eq.s32.totalorder %s18, 0
      %p80 = por %p78, %p79
      %p81 = scmp.ne.s32.totalorder %s70, %s73
      %p82 = scmp.eq.s32.totalorder %s23, 1
      %p83 = por %p81, %p82
      %p84 = scmp.ne.s32.totalorder %s73, %s74
      %p85 = scmp.eq.s32.totalorder %s23, 0
      %p86 = por %p84, %p85
      %p87 = scmp.ne.s32.totalorder %s73, %s74
      %p88 = scmp.eq.s32.totalorder %s24, 1
      %p89 = por %p87, %p88
      %p91 = scmp.ne.s32.totalorder %s74, %s90
      %p92 = scmp.eq.s32.totalorder %s24, 0
      %p93 = por %p91, %p92
      %s94 = ssub.s32 %s25, %s37
      %s95 = ssub.s32 %s26, %s33
      %s96 = sor.u32 %s94, %s95
      %p97 = scmp.eq.s32.totalorder %s96, 0
      %s99 = sadd.s32 %s98, 1
      %s100 = scalar_select %p97, %s98, %s99
      %p103 = pneg %p97
      %p104 = scmp.eq.s32.totalorder %s18, 1
      %p105 = por %p103, %p104
      %p106 = scmp.ne.s32.totalorder %s98, %s101
      %p107 = scmp.eq.s32.totalorder %s18, 0
      %p108 = por %p106, %p107
      %p109 = scmp.ne.s32.totalorder %s98, %s101
      %p110 = scmp.eq.s32.totalorder %s23, 1
      %p111 = por %p109, %p110
      %p112 = scmp.ne.s32.totalorder %s101, %s102
      %p113 = scmp.eq.s32.totalorder %s23, 0
      %p114 = por %p112, %p113
      %p115 = scmp.ne.s32.totalorder %s101, %s102
      %p116 = scmp.eq.s32.totalorder %s24, 1
      %p117 = por %p115, %p116
      %p119 = scmp.ne.s32.totalorder %s102, %s118
      %p120 = scmp.eq.s32.totalorder %s24, 0
      %p121 = por %p119, %p120
      %p122 = scmp.le.s32.totalorder 1, %s18
      %p123 = scmp.lt.s32.totalorder %s18, 3
      %p124 = pnand %p122, %p123
      %p125 = pneg %p124
      // Predicated region
      $region9: #{tpu_custom_call.1} parent=5 // pred_check
        _
      $region10: #{tpu_custom_call.1} parent=5 // pred_check_branch
        %127 = sbr.rel (%p124) target = $region12
      $region11: #{tpu_custom_call.1} parent=5 // pred_region
        %s128 = ssub.s32 %s18, 1
      $region12: #{tpu_custom_call.1} parent=5 // pred_fallthru
        _
      %p129 = scmp.lt.s32.totalorder %s18, 2
      // Predicated region
      $region13: #{tpu_custom_call.1} parent=5 // pred_check
        %p130 = pneg %p129
      $region14: #{tpu_custom_call.1} parent=5 // pred_check_branch
        %132 = sbr.rel (%p130) target = $region16
      $region15: #{tpu_custom_call.1} parent=5 // pred_region
        // Predicated region
        $region17: #{tpu_custom_call.1} parent=15 // pred_check
          %p133 = pneg %p52
        $region18: #{tpu_custom_call.1} parent=15 // pred_check_branch
          %135 = sbr.rel (%p133) target = $region20
        $region19: #{tpu_custom_call.1} parent=15 // pred_region
          %s136 = sand.u32 %s42, 1
          %s137 = scalar_lea.sflag [#allocation3], %s136
          %s138 = sand.u32 %s42, 1
          %s139 = smul.addr %s138, 64
          %s140 = scalar_lea.vmem [#allocation2], %s139
          %s142 = ssub.s32 1024, 1024
          %143 = vsyncadd %s137, %s142
          %s144 = sadd.s32 %s26, %s25
          %s145 = smul.addr %s144, 128
          %s146 = scalar_lea.hbm %s0, %s145
          %s147 = sshll.u32 %s140, 4
          %s148 = int_to_ptr.vmem [resolvable:$true] %s147
          %153 = dma.hbm_to_vmem [thread:$0]  %s146, 1024, %s148, %s137, 256, 128, 8
        $region20: #{tpu_custom_call.1} parent=15 // pred_fallthru
          _
      $region16: #{tpu_custom_call.1} parent=5 // pred_fallthru
        _
      %p154 = scmp.le.s32.totalorder 1, %s18
      %p155 = scmp.lt.s32.totalorder %s18, 3
      %p156 = pnand %p154, %p155
      %p157 = pneg %p156
      // Predicated region
      $region21: #{tpu_custom_call.1} parent=5 // pred_check
        _
      $region22: #{tpu_custom_call.1} parent=5 // pred_check_branch
        %159 = sbr.rel (%p156) target = $region24
      $region23: #{tpu_custom_call.1} parent=5 // pred_region
        %s160 = ssub.s32 %s18, 1
        %s161 = sand.u32 %s45, 1
        %s162 = scalar_lea.sflag [#allocation3], %s161
        %s163 = sand.u32 %s45, 1
        %s164 = smul.addr %s163, 64
        %s165 = scalar_lea.vmem [#allocation2], %s164
        // Predicated region
        $region25: #{tpu_custom_call.1} parent=23 // pred_check
          %p166 = pneg %p58
        $region26: #{tpu_custom_call.1} parent=23 // pred_check_branch
          %168 = sbr.rel (%p166) target = $region28
        $region27: #{tpu_custom_call.1} parent=23 // pred_region
          %169 = dma.done %s162, 1024
        $region28: #{tpu_custom_call.1} parent=23 // pred_fallthru
          _
        %s170 = sand.u32 %s45, 1
        %s171 = scalar_lea.sflag [#allocation3], %s170
        %s172 = sand.u32 %s45, 1
        %s173 = smul.addr %s172, 64
        %s174 = scalar_lea.vmem [#allocation2], %s173
        %p175 = pneg %p58
        %p176 = pneg %p55
        %p177 = pneg %p86
        %p178 = pneg %p83
        %s179 = sand.u32 %s73, 1
        %s180 = scalar_lea.sflag [#allocation4], %s179
        %s181 = sand.u32 %s73, 1
        %s182 = smul.addr %s181, 8
        %s183 = scalar_lea.vmem [#allocation5], %s182
        %p184 = pneg %p114
        %p185 = pneg %p111
        %s186 = sand.u32 %s101, 1
        %s187 = scalar_lea.sflag [#allocation7], %s186
        %s188 = sand.u32 %s101, 1
        %s189 = smul.addr %s188, 8
        %s190 = scalar_lea.vmem [#allocation6], %s189
        %v191 = vld [vmem:[%s165] sm:$0xff]
        %v192 = vld [vmem:[%s165 + $0x8] sm:$0xff]
        %v193 = vld [vmem:[%s165 + $0x10] sm:$0xff]
        %v194 = vld [vmem:[%s165 + $0x18] sm:$0xff]
        %v195 = vld [vmem:[%s165 + $0x20] sm:$0xff]
        %v196 = vld [vmem:[%s165 + $0x28] sm:$0xff]
        %v197 = vld [vmem:[%s165 + $0x30] sm:$0xff]
        %v198 = vld [vmem:[%s165 + $0x38] sm:$0xff]
        %v199 = vmin.f32 %v191, %v195
        %v200 = vmin.f32 %v192, %v196
        %v201 = vmin.f32 %v193, %v197
        %v202 = vmin.f32 %v194, %v198
        %v203 = vmin.f32 %v199, %v200
        %v204 = vmin.f32 %v201, %v202
        %v205 = vmin.f32 %v203, %v204
        %vm206 = vcmp.le.f32.partialorder %v191, %v205
        %vm207 = vcmp.le.f32.partialorder %v192, %v205
        %vm208 = vcmp.le.f32.partialorder %v193, %v205
        %vm209 = vcmp.le.f32.partialorder %v194, %v205
        %vm210 = vcmp.le.f32.partialorder %v195, %v205
        %vm211 = vcmp.le.f32.partialorder %v196, %v205
        %vm212 = vcmp.le.f32.partialorder %v197, %v205
        %vm213 = vcmp.le.f32.partialorder %v198, %v205
        %vm214 = vcmp.ne.f32.partialorder %v191, %v191
        %vm215 = vcmp.ne.f32.partialorder %v192, %v192
        %vm216 = vcmp.ne.f32.partialorder %v193, %v193
        %vm217 = vcmp.ne.f32.partialorder %v194, %v194
        %vm218 = vcmp.ne.f32.partialorder %v195, %v195
        %vm219 = vcmp.ne.f32.partialorder %v196, %v196
        %vm220 = vcmp.ne.f32.partialorder %v197, %v197
        %vm221 = vcmp.ne.f32.partialorder %v198, %v198
        %vm222 = vmor %vm206, %vm214
        %vm223 = vmor %vm207, %vm215
        %vm224 = vmor %vm208, %vm216
        %vm225 = vmor %vm209, %vm217
        %vm226 = vmor %vm210, %vm218
        %vm227 = vmor %vm211, %vm219
        %vm228 = vmor %vm212, %vm220
        %vm229 = vmor %vm213, %vm221
        %v230 = vsel %vm222, 0, 8
        %v231 = vsel %vm223, 1, 8
        %v232 = vsel %vm224, 2, 8
        %v233 = vsel %vm225, 3, 8
        %v234 = vsel %vm226, 4, 8
        %v235 = vsel %vm227, 5, 8
        %v236 = vsel %vm228, 6, 8
        %v237 = vsel %vm229, 7, 8
        %vm238 = vcmp.lt.s32.totalorder %v230, %v234
        %v239 = vsel %vm238, %v230, %v234
        %vm240 = vcmp.lt.s32.totalorder %v231, %v235
        %v241 = vsel %vm240, %v231, %v235
        %vm242 = vcmp.lt.s32.totalorder %v232, %v236
        %v243 = vsel %vm242, %v232, %v236
        %vm244 = vcmp.lt.s32.totalorder %v233, %v237
        %v245 = vsel %vm244, %v233, %v237
        %vm246 = vcmp.lt.s32.totalorder %v239, %v241
        %v247 = vsel %vm246, %v239, %v241
        %vm248 = vcmp.lt.s32.totalorder %v243, %v245
        %v249 = vsel %vm248, %v243, %v245
        %vm250 = vcmp.lt.s32.totalorder %v247, %v249
        %v251 = vsel %vm250, %v247, %v249
        %252 = vst [vmem:[%s183] sm:$0xff] %v205
        %253 = vst [vmem:[%s190] sm:$0xff] %v251
        %s254 = sand.u32 %s73, 1
        %s255 = scalar_lea.sflag [#allocation4], %s254
        %s256 = sand.u32 %s73, 1
        %s257 = smul.addr %s256, 8
        %s258 = scalar_lea.vmem [#allocation5], %s257
        %s259 = sand.u32 %s101, 1
        %s260 = scalar_lea.sflag [#allocation7], %s259
        %s261 = sand.u32 %s101, 1
        %s262 = smul.addr %s261, 8
        %s263 = scalar_lea.vmem [#allocation6], %s262
        // Predicated region
        $region29: #{tpu_custom_call.1} parent=23 // pred_check
          %p264 = pneg %p83
        $region30: #{tpu_custom_call.1} parent=23 // pred_check_branch
          %266 = sbr.rel (%p264) target = $region32
        $region31: #{tpu_custom_call.1} parent=23 // pred_region
          %s268 = ssub.s32 128, 128
          %269 = vsyncadd %s255, %s268
          %s270 = sadd.s32 %s28, %s27
          %s271 = smul.addr %s270, 128
          %s272 = scalar_lea.hbm %s1, %s271
          %s274 = sshll.u32 %s258, 4
          %s275 = int_to_ptr.vmem [resolvable:$true] %s274
          %277 = dma.vmem_to_hbm [thread:$0]  %s275, 128, %s272, %s255
        $region32: #{tpu_custom_call.1} parent=23 // pred_fallthru
          _
        // Predicated region
        $region33: #{tpu_custom_call.1} parent=23 // pred_check
          %p278 = pneg %p111
        $region34: #{tpu_custom_call.1} parent=23 // pred_check_branch
          %280 = sbr.rel (%p278) target = $region36
        $region35: #{tpu_custom_call.1} parent=23 // pred_region
          %s282 = ssub.s32 128, 128
          %283 = vsyncadd %s260, %s282
          %s284 = sadd.s32 %s28, %s27
          %s285 = smul.addr %s284, 128
          %s286 = scalar_lea.hbm %s2, %s285
          %s288 = sshll.u32 %s263, 4
          %s289 = int_to_ptr.vmem [resolvable:$true] %s288
          %291 = dma.vmem_to_hbm [thread:$0]  %s289, 128, %s286, %s260
        $region36: #{tpu_custom_call.1} parent=23 // pred_fallthru
          _
      $region24: #{tpu_custom_call.1} parent=5 // pred_fallthru
        _
      %p292 = scmp.le.s32.totalorder 2, %s18
      // Predicated region
      $region37: #{tpu_custom_call.1} parent=5 // pred_check
        %p293 = pneg %p292
      $region38: #{tpu_custom_call.1} parent=5 // pred_check_branch
        %295 = sbr.rel (%p293) target = $region40
      $region39: #{tpu_custom_call.1} parent=5 // pred_region
        %s296 = ssub.s32 %s18, 2
        // Predicated region
        $region41: #{tpu_custom_call.1} parent=39 // pred_check
          %p297 = pneg %p89
        $region42: #{tpu_custom_call.1} parent=39 // pred_check_branch
          %299 = sbr.rel (%p297) target = $region44
        $region43: #{tpu_custom_call.1} parent=39 // pred_region
          %s300 = sand.u32 %s74, 1
          %s301 = scalar_lea.sflag [#allocation4], %s300
          %s302 = sand.u32 %s74, 1
          %s303 = smul.addr %s302, 8
          %s304 = scalar_lea.vmem [#allocation5], %s303
          %305 = dma.done %s301, 128
        $region44: #{tpu_custom_call.1} parent=39 // pred_fallthru
          _
        // Predicated region
        $region45: #{tpu_custom_call.1} parent=39 // pred_check
          %p306 = pneg %p117
        $region46: #{tpu_custom_call.1} parent=39 // pred_check_branch
          %308 = sbr.rel (%p306) target = $region48
        $region47: #{tpu_custom_call.1} parent=39 // pred_region
          %s309 = sand.u32 %s102, 1
          %s310 = scalar_lea.sflag [#allocation7], %s309
          %s311 = sand.u32 %s102, 1
          %s312 = smul.addr %s311, 8
          %s313 = scalar_lea.vmem [#allocation6], %s312
          %314 = dma.done %s310, 128
        $region48: #{tpu_custom_call.1} parent=39 // pred_fallthru
          _
      $region40: #{tpu_custom_call.1} parent=5 // pred_fallthru
        _
    $region6: #{tpu_custom_call.1} parent=1 // loop_footer
      %s22 = sadd.s32 1, %s18
    $region7: #{tpu_custom_call.1} parent=1 // loop_footer_branch
      %17 = sbr.rel target = $region3
    $region8: #{tpu_custom_call.1} parent=1 // loop_exit
      _
    %315 = vsyncpa [#allocation3], 1
    %s316 = scalar_lea.sflag [#allocation3], 1
    %317 = vsyncpa %s316, 1
    %318 = vsyncpa [#allocation4], 1
    %s319 = scalar_lea.sflag [#allocation4], 1
    %320 = vsyncpa %s319, 1
    %321 = vsyncpa [#allocation7], 1
    %s322 = scalar_lea.sflag [#allocation7], 1
    %323 = vsyncpa %s322, 1

</llo_original>
